<compile_context>
chip_gen: v5e
topology: v5e:2x2
jax: 0.10.0
libtpu: 0.0.40
codegen_flags: <defaults>
</compile_context>

<pallas_src>
import numpy as np
import jax
import jax.numpy as jnp
from jax.experimental import pallas as pl
from jax.experimental.pallas import tpu as pltpu

critic_net = {"fc1_units": 200, "fc2_units": 150}

LANE = 128      # TPU lane width (last dim)
SUBLANE = 8     # TPU sublane width (second-to-last dim)
OUT_COLS = 8    # narrow padded output width (real Q-value lives in column 0)


def _round_up(x, m):
    return ((x + m - 1) // m) * m


def critic_kernel(s_ref, a_ref, w1s_ref, w1a_ref, b1_ref,
                  w2_ref, b2_ref, w3_ref, b3_ref, out_ref):
    # Activations arrive as f32 straight from HBM; cast to bf16 right before
    # the MXU dots (VPU cast is hidden under DMA slack).
    s = s_ref[...].astype(jnp.bfloat16)
    a = a_ref[...].astype(jnp.bfloat16)
    # layer1: fused concat -> xs @ W1 == state @ W1_s + action @ W1_a
    h1 = (jnp.dot(s, w1s_ref[...], preferred_element_type=jnp.float32)
          + jnp.dot(a, w1a_ref[...], preferred_element_type=jnp.float32))
    h1 = jnp.maximum(h1 + b1_ref[...], 0.0)
    # layer2: Linear + ReLU
    h2 = jnp.dot(h1.astype(jnp.bfloat16), w2_ref[...],
                 preferred_element_type=jnp.float32)
    h2 = jnp.maximum(h2 + b2_ref[...], 0.0)
    # layer3: Linear (no activation), narrow (TB, 8) output block.
    out = jnp.dot(h2.astype(jnp.bfloat16), w3_ref[...],
                  preferred_element_type=jnp.float32)
    out_ref[...] = out + b3_ref[...]


def init_params(key, state_size, action_size,
                fc1_units=critic_net["fc1_units"], fc2_units=critic_net["fc2_units"]):
    """Deterministic init mirroring Critic.reset_parameters (uniform ranges)."""
    in_dim = state_size * 2 + action_size * 2
    k = jax.random.split(key, 6)
    # hidden_init uses weight.size()[0] (= out_features in PyTorch storage).
    lim1 = 1.0 / np.sqrt(fc1_units)
    lim2 = 1.0 / np.sqrt(fc2_units)
    w1 = jax.random.uniform(k[0], (in_dim, fc1_units), jnp.float32, -lim1, lim1)
    w2 = jax.random.uniform(k[1], (fc1_units, fc2_units), jnp.float32, -lim2, lim2)
    w3 = jax.random.uniform(k[2], (fc2_units, 1), jnp.float32, -3e-3, 3e-3)
    # Biases keep PyTorch nn.Linear default uniform(-1/sqrt(fan_in), +...).
    b1 = jax.random.uniform(k[3], (1, fc1_units), jnp.float32,
                            -1.0 / np.sqrt(in_dim), 1.0 / np.sqrt(in_dim))
    b2 = jax.random.uniform(k[4], (1, fc2_units), jnp.float32,
                            -1.0 / np.sqrt(fc1_units), 1.0 / np.sqrt(fc1_units))
    b3 = jax.random.uniform(k[5], (1, 1), jnp.float32,
                            -1.0 / np.sqrt(fc2_units), 1.0 / np.sqrt(fc2_units))
    return (w1, b1, w2, b2, w3, b3)


def prepare_params(params, state_dim, action_dim):
    """Split w1, zero-pad hidden dims to lane multiples / output to 8 cols,
    cast MXU operands to bf16.  Zero padding is exact through matmul+bias+ReLU."""
    w1, b1, w2, b2, w3, b3 = params
    in_dim, f1 = w1.shape
    f2 = w2.shape[1]
    assert in_dim == state_dim + action_dim
    F1 = _round_up(f1, LANE)    # 200 -> 256
    F2 = _round_up(f2, LANE)    # 150 -> 256

    w1s = jnp.pad(w1[:state_dim], ((0, 0), (0, F1 - f1))).astype(jnp.bfloat16)
    w1a = jnp.pad(w1[state_dim:], ((0, 0), (0, F1 - f1))).astype(jnp.bfloat16)
    b1p = jnp.pad(b1, ((0, 0), (0, F1 - f1))).astype(jnp.float32)
    w2p = jnp.pad(w2, ((0, F1 - f1), (0, F2 - f2))).astype(jnp.bfloat16)
    b2p = jnp.pad(b2, ((0, 0), (0, F2 - f2))).astype(jnp.float32)
    w3p = jnp.pad(w3, ((0, F2 - f2), (0, OUT_COLS - w3.shape[1]))).astype(jnp.bfloat16)
    b3p = jnp.pad(b3, ((0, 0), (0, OUT_COLS - b3.shape[1]))).astype(jnp.float32)
    return (w1s, w1a, b1p, w2p, b2p, w3p, b3p)


def _pick_tb(B, block_b):
    """Adaptive batch tile: largest power-of-two multiple of 8 <= block_b with
    <=~12.5% padding waste; capped so the grid has >=2 steps when possible
    (lets v7x megacore split the batch across its two TensorCores)."""
    Bp = _round_up(max(B, 1), SUBLANE)
    cap = min(block_b, Bp)
    if Bp >= 2 * SUBLANE:
        cap = min(cap, (Bp // 2) // SUBLANE * SUBLANE)
    tb = SUBLANE
    t = SUBLANE
    while t <= cap:
        padded = _round_up(Bp, t)
        if padded - Bp <= padded // 8:
            tb = t
        t *= 2
    return tb


def critic_forward(state, action, prepared, *, block_b=1024):
    """state: (B, 2*state_size) f32, action: (B, 2*action_size) f32 -> (B, 1) Q."""
    w1s, w1a, b1, w2, b2, w3, b3 = prepared
    B, Ds = state.shape
    Da = action.shape[1]

    TB = _pick_tb(B, block_b)
    padded_B = _round_up(max(B, 1), TB)
    grid = (padded_B // TB,)

    # Keep activations f32 in HBM (no wrapper-side cast pass); pad rows only
    # when the batch doesn't tile evenly.  Padded rows produce garbage Q-values
    # that are sliced away below.
    if padded_B != B:
        state = jnp.pad(state, ((0, padded_B - B), (0, 0)))
        action = jnp.pad(action, ((0, padded_B - B), (0, 0)))

    row_spec = lambda cols: pl.BlockSpec((TB, cols), lambda i: (i, 0))
    # Weights/biases never change across the grid: keep them VMEM-resident and
    # single-buffered (default double-buffering just wastes VMEM on them).
    resident = lambda t: pl.BlockSpec(t.shape, lambda i: (0, 0),
                                      pipeline_mode=pl.Buffered(1))

    flops = 2 * padded_B * (Ds * w1s.shape[1] + Da * w1a.shape[1]
                            + w2.shape[0] * w2.shape[1]
                            + w3.shape[0] * w3.shape[1])
    bytes_accessed = (padded_B * (Ds + Da) * 4
                      + sum(int(t.size) * t.dtype.itemsize
                            for t in (w1s, w1a, b1, w2, b2, w3, b3))
                      + padded_B * OUT_COLS * 4)

    out = pl.pallas_call(
        critic_kernel,
        out_shape=jax.ShapeDtypeStruct((padded_B, OUT_COLS), jnp.float32),
        grid=grid,
        in_specs=[row_spec(Ds), row_spec(Da),
                  resident(w1s), resident(w1a), resident(b1),
                  resident(w2), resident(b2),
                  resident(w3), resident(b3)],
        out_specs=pl.BlockSpec((TB, OUT_COLS), lambda i: (i, 0)),
        compiler_params=pltpu.CompilerParams(
            dimension_semantics=("parallel",),          # megacore on v7x
            vmem_limit_bytes=32 * 1024 * 1024),
        cost_estimate=pl.CostEstimate(flops=flops, transcendentals=0,
                                      bytes_accessed=bytes_accessed),
    )(state, action, w1s, w1a, b1, w2, b2, w3, b3)

    return out[:B, :1]


if __name__ == "__main__":
    state_size, action_size, batch = 8, 4, 8

    key = jax.random.PRNGKey(0)
    kp, ks, ka = jax.random.split(key, 3)
    params = init_params(kp, state_size, action_size)
    prepared = prepare_params(params, state_size * 2, action_size * 2)

    state = jax.random.normal(ks, (batch, state_size * 2), jnp.float32)
    action = jax.random.normal(ka, (batch, action_size * 2), jnp.float32)

    out = jax.block_until_ready(jax.jit(critic_forward)(state, action, prepared))

    # Pure-JAX reference with matching bf16-operand / f32-accumulate math.
    # TODO(synk): kernel uses bf16 MXU operands; swap to f32 dots if bit-level
    # parity with the f32 PyTorch Critic is required (perf cost is negligible).
    w1, b1, w2, b2, w3, b3 = params
    xs = jnp.concatenate([state, action], axis=1).astype(jnp.bfloat16)
    h1 = jnp.maximum(jnp.dot(xs, w1.astype(jnp.bfloat16),
                             preferred_element_type=jnp.float32) + b1, 0.0)
    h2 = jnp.maximum(jnp.dot(h1.astype(jnp.bfloat16), w2.astype(jnp.bfloat16),
                             preferred_element_type=jnp.float32) + b2, 0.0)
    ref = jnp.dot(h2.astype(jnp.bfloat16), w3.astype(jnp.bfloat16),
                  preferred_element_type=jnp.float32) + b3
    np.testing.assert_allclose(np.asarray(out), np.asarray(ref), rtol=5e-3, atol=5e-3)

    assert out.shape == (batch, 1)
    print("KERNEL_OK")
</pallas_src>

<mosaic_0001>
module attributes {stable_mosaic.version = 11 : i64} {
  func.func @critic_kernel(%arg0: i32, %arg1: memref<8x16xf32, #tpu.memory_space<vmem>>, %arg2: memref<8x8xf32, #tpu.memory_space<vmem>>, %arg3: memref<16x256xbf16, #tpu.memory_space<vmem>>, %arg4: memref<8x256xbf16, #tpu.memory_space<vmem>>, %arg5: memref<1x256xf32, #tpu.memory_space<vmem>>, %arg6: memref<256x256xbf16, #tpu.memory_space<vmem>>, %arg7: memref<1x256xf32, #tpu.memory_space<vmem>>, %arg8: memref<256x8xbf16, #tpu.memory_space<vmem>>, %arg9: memref<1x8xf32, #tpu.memory_space<vmem>>, %arg10: memref<8x8xf32, #tpu.memory_space<vmem>>) attributes {dimension_semantics = [#tpu.dimension_semantics<parallel>], iteration_bounds = array<i64: 1>, scalar_prefetch = 0 : i64, scratch_operands = 0 : i64, tpu.core_type = #tpu.core_type<tc>, window_params = [{transform_indices = @transform_0, window_bounds = array<i64: 8, 16>}, {transform_indices = @transform_1, window_bounds = array<i64: 8, 8>}, {pipeline_mode = #tpu.pipeline_mode<synchronous>, transform_indices = @transform_2, window_bounds = array<i64: 16, 256>}, {pipeline_mode = #tpu.pipeline_mode<synchronous>, transform_indices = @transform_3, window_bounds = array<i64: 8, 256>}, {pipeline_mode = #tpu.pipeline_mode<synchronous>, transform_indices = @transform_4, window_bounds = array<i64: 1, 256>}, {pipeline_mode = #tpu.pipeline_mode<synchronous>, transform_indices = @transform_5, window_bounds = array<i64: 256, 256>}, {pipeline_mode = #tpu.pipeline_mode<synchronous>, transform_indices = @transform_6, window_bounds = array<i64: 1, 256>}, {pipeline_mode = #tpu.pipeline_mode<synchronous>, transform_indices = @transform_7, window_bounds = array<i64: 256, 8>}, {pipeline_mode = #tpu.pipeline_mode<synchronous>, transform_indices = @transform_8, window_bounds = array<i64: 1, 8>}, {transform_indices = @transform_9, window_bounds = array<i64: 8, 8>}]} {
    %c0 = arith.constant 0 : index
    %c0_0 = arith.constant 0 : index
    %0 = vector.load %arg1[%c0, %c0_0] : memref<8x16xf32, #tpu.memory_space<vmem>>, vector<8x16xf32>
    %1 = arith.truncf %0 : vector<8x16xf32> to vector<8x16xbf16>
    %c0_1 = arith.constant 0 : index
    %c0_2 = arith.constant 0 : index
    %2 = vector.load %arg2[%c0_1, %c0_2] : memref<8x8xf32, #tpu.memory_space<vmem>>, vector<8x8xf32>
    %3 = arith.truncf %2 : vector<8x8xf32> to vector<8x8xbf16>
    %c0_3 = arith.constant 0 : index
    %c0_4 = arith.constant 0 : index
    %4 = vector.load %arg3[%c0_3, %c0_4] : memref<16x256xbf16, #tpu.memory_space<vmem>>, vector<16x256xbf16>
    %cst = arith.constant dense<0.000000e+00> : vector<8x256xf32>
    %5 = tpu.matmul %1, %4, %cst {dimension_numbers = #tpu.dot_dimension_numbers<[1], [0], [0], [1], [0, 0, 1, 1], [], []>} : vector<8x16xbf16>, vector<16x256xbf16>, vector<8x256xf32> -> vector<8x256xf32>
    %c0_5 = arith.constant 0 : index
    %c0_6 = arith.constant 0 : index
    %6 = vector.load %arg4[%c0_5, %c0_6] : memref<8x256xbf16, #tpu.memory_space<vmem>>, vector<8x256xbf16>
    %cst_7 = arith.constant dense<0.000000e+00> : vector<8x256xf32>
    %7 = tpu.matmul %3, %6, %cst_7 {dimension_numbers = #tpu.dot_dimension_numbers<[1], [0], [0], [1], [0, 0, 1, 1], [], []>} : vector<8x8xbf16>, vector<8x256xbf16>, vector<8x256xf32> -> vector<8x256xf32>
    %8 = arith.addf %5, %7 : vector<8x256xf32>
    %c0_8 = arith.constant 0 : index
    %c0_9 = arith.constant 0 : index
    %9 = vector.load %arg5[%c0_8, %c0_9] : memref<1x256xf32, #tpu.memory_space<vmem>>, vector<1x256xf32>
    %10 = vector.broadcast %9 : vector<1x256xf32> to vector<8x256xf32>
    %11 = arith.addf %8, %10 : vector<8x256xf32>
    %cst_10 = arith.constant 0.000000e+00 : f32
    %12 = vector.broadcast %cst_10 : f32 to vector<8x256xf32>
    %13 = arith.maximumf %11, %12 : vector<8x256xf32>
    %14 = arith.truncf %13 : vector<8x256xf32> to vector<8x256xbf16>
    %c0_11 = arith.constant 0 : index
    %c0_12 = arith.constant 0 : index
    %15 = vector.load %arg6[%c0_11, %c0_12] : memref<256x256xbf16, #tpu.memory_space<vmem>>, vector<256x256xbf16>
    %cst_13 = arith.constant dense<0.000000e+00> : vector<8x256xf32>
    %16 = tpu.matmul %14, %15, %cst_13 {dimension_numbers = #tpu.dot_dimension_numbers<[1], [0], [0], [1], [0, 0, 1, 1], [], []>} : vector<8x256xbf16>, vector<256x256xbf16>, vector<8x256xf32> -> vector<8x256xf32>
    %c0_14 = arith.constant 0 : index
    %c0_15 = arith.constant 0 : index
    %17 = vector.load %arg7[%c0_14, %c0_15] : memref<1x256xf32, #tpu.memory_space<vmem>>, vector<1x256xf32>
    %18 = vector.broadcast %17 : vector<1x256xf32> to vector<8x256xf32>
    %19 = arith.addf %16, %18 : vector<8x256xf32>
    %cst_16 = arith.constant 0.000000e+00 : f32
    %20 = vector.broadcast %cst_16 : f32 to vector<8x256xf32>
    %21 = arith.maximumf %19, %20 : vector<8x256xf32>
    %22 = arith.truncf %21 : vector<8x256xf32> to vector<8x256xbf16>
    %c0_17 = arith.constant 0 : index
    %c0_18 = arith.constant 0 : index
    %23 = vector.load %arg8[%c0_17, %c0_18] : memref<256x8xbf16, #tpu.memory_space<vmem>>, vector<256x8xbf16>
    %cst_19 = arith.constant dense<0.000000e+00> : vector<8x8xf32>
    %24 = tpu.matmul %22, %23, %cst_19 {dimension_numbers = #tpu.dot_dimension_numbers<[1], [0], [0], [1], [0, 0, 1, 1], [], []>} : vector<8x256xbf16>, vector<256x8xbf16>, vector<8x8xf32> -> vector<8x8xf32>
    %c0_20 = arith.constant 0 : index
    %c0_21 = arith.constant 0 : index
    %25 = vector.load %arg9[%c0_20, %c0_21] : memref<1x8xf32, #tpu.memory_space<vmem>>, vector<1x8xf32>
    %26 = vector.broadcast %25 : vector<1x8xf32> to vector<8x8xf32>
    %27 = arith.addf %24, %26 : vector<8x8xf32>
    %c0_22 = arith.constant 0 : index
    %c0_23 = arith.constant 0 : index
    %28 = vector.load %arg10[%c0_22, %c0_23] : memref<8x8xf32, #tpu.memory_space<vmem>>, vector<8x8xf32>
    tpu.vector_store %arg10[%c0_22, %c0_23], %27 {strides = array<i32>} : memref<8x8xf32, #tpu.memory_space<vmem>>, vector<8x8xf32>,
    return
  }
  func.func @transform_0(%arg0: i32) -> (i32, i32) {
    %c0_i32 = arith.constant 0 : i32
    %c0_i32_0 = arith.constant 0 : i32
    return %arg0, %c0_i32 : i32, i32
  }
  func.func @transform_1(%arg0: i32) -> (i32, i32) {
    %c0_i32 = arith.constant 0 : i32
    %c0_i32_0 = arith.constant 0 : i32
    return %arg0, %c0_i32 : i32, i32
  }
  func.func @transform_2(%arg0: i32) -> (i32, i32) {
    %c0_i32 = arith.constant 0 : i32
    %c0_i32_0 = arith.constant 0 : i32
    %c0_i32_1 = arith.constant 0 : i32
    return %c0_i32, %c0_i32_0 : i32, i32
  }
  func.func @transform_3(%arg0: i32) -> (i32, i32) {
    %c0_i32 = arith.constant 0 : i32
    %c0_i32_0 = arith.constant 0 : i32
    %c0_i32_1 = arith.constant 0 : i32
    return %c0_i32, %c0_i32_0 : i32, i32
  }
  func.func @transform_4(%arg0: i32) -> (i32, i32) {
    %c0_i32 = arith.constant 0 : i32
    %c0_i32_0 = arith.constant 0 : i32
    %c0_i32_1 = arith.constant 0 : i32
    return %c0_i32, %c0_i32_0 : i32, i32
  }
  func.func @transform_5(%arg0: i32) -> (i32, i32) {
    %c0_i32 = arith.constant 0 : i32
    %c0_i32_0 = arith.constant 0 : i32
    %c0_i32_1 = arith.constant 0 : i32
    return %c0_i32, %c0_i32_0 : i32, i32
  }
  func.func @transform_6(%arg0: i32) -> (i32, i32) {
    %c0_i32 = arith.constant 0 : i32
    %c0_i32_0 = arith.constant 0 : i32
    %c0_i32_1 = arith.constant 0 : i32
    return %c0_i32, %c0_i32_0 : i32, i32
  }
  func.func @transform_7(%arg0: i32) -> (i32, i32) {
    %c0_i32 = arith.constant 0 : i32
    %c0_i32_0 = arith.constant 0 : i32
    %c0_i32_1 = arith.constant 0 : i32
    return %c0_i32, %c0_i32_0 : i32, i32
  }
  func.func @transform_8(%arg0: i32) -> (i32, i32) {
    %c0_i32 = arith.constant 0 : i32
    %c0_i32_0 = arith.constant 0 : i32
    %c0_i32_1 = arith.constant 0 : i32
    return %c0_i32, %c0_i32_0 : i32, i32
  }
  func.func @transform_9(%arg0: i32) -> (i32, i32) {
    %c0_i32 = arith.constant 0 : i32
    %c0_i32_0 = arith.constant 0 : i32
    return %arg0, %c0_i32 : i32, i32
  }
}

</mosaic_0001>

<llo_original>
// kernel: critic_forward.1
$region0: #{critic_forward.1}
  #allocation0 [shape = 'u32[]', space=smem, size = 0x4, offset = 0x4, fixed_abs, tag = 'smem constant byte address 0x4 - core index']
  #allocation1 [shape = 'u32[72,128]{1,0:T(1,128)}', space=vmem, size = 0x9000, scoped, tag = 'internal scratch']
  %s0 = inlined_call_operand.vmem [shape: f32[8,16], index: 0, kind: input, shape index: {}]
  %s1 = inlined_call_operand.vmem [shape: f32[8,8], index: 1, kind: input, shape index: {}]
  %s2 = inlined_call_operand.vmem [shape: bf16[16,256], index: 2, kind: input, shape index: {}]
  %s3 = inlined_call_operand.vmem [shape: bf16[8,256], index: 3, kind: input, shape index: {}]
  %s4 = inlined_call_operand.vmem [shape: f32[1,256], index: 4, kind: input, shape index: {}]
  %s5 = inlined_call_operand.hbm [shape: bf16[256,256], index: 5, kind: input, shape index: {}]
  %s6 = inlined_call_operand.vmem [shape: f32[1,256], index: 6, kind: input, shape index: {}]
  %s7 = inlined_call_operand.vmem [shape: bf16[256,8], index: 7, kind: input, shape index: {}]
  %s8 = inlined_call_operand.vmem [shape: f32[1,8], index: 8, kind: input, shape index: {}]
  %s9 = inlined_call_operand.vmem [shape: f32[8,8], index: 9, kind: output, shape index: {}]
  %s10 = sld [smem:[#allocation0]]
  $region50: #{critic_forward.1} parent=0
    _
  %s12 = ssub.s32 1, %s10
  %s13 = scalar_select 0, %s12, %s10
  $region1: #{critic_forward.1} parent=0
    #allocation2 [shape = 'u8[131072]{0}', space=vmem, size = 0x20000, scoped, tag = 'input window, operand 5, single buffered']
    #allocation3 [shape = 's32[1]{0}', space=sflag, size = 0x4, scoped, tag = 'scoped memory for critic_forward.1']
    %14 = vsyncpa [#allocation3], 0
    // Predicated region
    $region2: #{critic_forward.1} parent=1 // pred_check
      _
    $region3: #{critic_forward.1} parent=1 // pred_check_branch
      %16 = sbr.rel (0) target = $region5
    $region4: #{critic_forward.1} parent=1 // pred_region
      _
    $region5: #{critic_forward.1} parent=1 // pred_fallthru
      _
    // Predicated region
    $region6: #{critic_forward.1} parent=1 // pred_check
      _
    $region7: #{critic_forward.1} parent=1 // pred_check_branch
      %18 = sbr.rel (0) target = $region9
    $region8: #{critic_forward.1} parent=1 // pred_region
      _
    $region9: #{critic_forward.1} parent=1 // pred_fallthru
      _
    // Predicated region
    $region10: #{critic_forward.1} parent=1 // pred_check
      _
    $region11: #{critic_forward.1} parent=1 // pred_check_branch
      %20 = sbr.rel (0) target = $region13
    $region12: #{critic_forward.1} parent=1 // pred_region
      _
    $region13: #{critic_forward.1} parent=1 // pred_fallthru
      _
    // Predicated region
    $region14: #{critic_forward.1} parent=1 // pred_check
      _
    $region15: #{critic_forward.1} parent=1 // pred_check_branch
      %22 = sbr.rel (0) target = $region17
    $region16: #{critic_forward.1} parent=1 // pred_region
      _
    $region17: #{critic_forward.1} parent=1 // pred_fallthru
      _
    // Predicated region
    $region18: #{critic_forward.1} parent=1 // pred_check
      _
    $region19: #{critic_forward.1} parent=1 // pred_check_branch
      %24 = sbr.rel (0) target = $region21
    $region20: #{critic_forward.1} parent=1 // pred_region
      _
    $region21: #{critic_forward.1} parent=1 // pred_fallthru
      _
    // Predicated region
    $region22: #{critic_forward.1} parent=1 // pred_check
      _
    $region23: #{critic_forward.1} parent=1 // pred_check_branch
      %26 = sbr.rel (0) target = $region25
    $region24: #{critic_forward.1} parent=1 // pred_region
      %28 = vsyncadd [#allocation3], 0
      %s29 = sshll.u32 %s5, 4
      %s30 = int_to_ptr.hbm [resolvable:$true] %s29
      %s31 = sshll.u32 [#allocation2], 4
      %s32 = int_to_ptr.vmem [resolvable:$true] %s31
      %37 = dma.hbm_to_vmem [thread:$0]  %s30, 4096, %s32, [#allocation3], 128, 128, 8
    $region25: #{critic_forward.1} parent=1 // pred_fallthru
      _
    // Predicated region
    $region26: #{critic_forward.1} parent=1 // pred_check
      _
    $region27: #{critic_forward.1} parent=1 // pred_check_branch
      %39 = sbr.rel (0) target = $region29
    $region28: #{critic_forward.1} parent=1 // pred_region
      _
    $region29: #{critic_forward.1} parent=1 // pred_fallthru
      _
    // Predicated region
    $region30: #{critic_forward.1} parent=1 // pred_check
      _
    $region31: #{critic_forward.1} parent=1 // pred_check_branch
      %41 = sbr.rel (0) target = $region33
    $region32: #{critic_forward.1} parent=1 // pred_region
      _
    $region33: #{critic_forward.1} parent=1 // pred_fallthru
      _
    // Predicated region
    $region34: #{critic_forward.1} parent=1 // pred_check
      _
    $region35: #{critic_forward.1} parent=1 // pred_check_branch
      %43 = sbr.rel (0) target = $region37
    $region36: #{critic_forward.1} parent=1 // pred_region
      _
    $region37: #{critic_forward.1} parent=1 // pred_fallthru
      _
    // Predicated region
    $region38: #{critic_forward.1} parent=1 // pred_check
      _
    $region39: #{critic_forward.1} parent=1 // pred_check_branch
      %45 = sbr.rel (0) target = $region41
    $region40: #{critic_forward.1} parent=1 // pred_region
      %47 = dma.done [#allocation3], 4096
    $region41: #{critic_forward.1} parent=1 // pred_fallthru
      _
    %v49 = vld [vmem:[%s0] sm:$0xff]
    %v50 = vpack.c.bf16 %v49, %v49
    %v51 = vld [vmem:[%s1] sm:$0xff]
    %v52 = vpack.c.bf16 %v51, %v51
    %v53 = vld [vmem:[%s2] sm:$0xff]
    %v54 = vld [vmem:[%s2 + $0x8] sm:$0xff]
    %v55 = vld [vmem:[%s3] sm:$0xff]
    %v57 = vunpack.c.l.b16 %v55
    %v58 = vunpack.c.h.b16 %v55
    %v59 = vpack.c.b16 %v57, %v57
    %v60 = vpack.c.b16 %v58, %v58
    %vm61 = vcmask 64512
    %v63 = vsel %vm61, %v52, 0
    %vm65 = vcmask 1043456
    %v67 = vsel %vm65, %v59, 0
    %v70 = vsel %vm65, %v60, 0
    %72 = vmatpush.bf16.msra.mxu0 0
    %73 = vmatpush.bf16.msra.mxu0 0
    %74 = vmatpush.bf16.msra.mxu0 0
    %75 = vmatpush.bf16.msra.mxu0 0
    %76 = vmatpush.bf16.msra.mxu0 0
    %77 = vmatpush.bf16.msra.mxu0 0
    %78 = vmatpush.bf16.msra.mxu0 0
    %79 = vmatpush.bf16.msra.mxu0 %v67
    %80 = vmatmul.bf16.gmra.mxu0 %v63
    %v81 = vpop.f32.mrf.mxu0
    %v82 = vadd.f32 0.0, %v81
    %v83 = vpop.f32.mrf.mxu0
    %84 = vdwg.mxu0
    %85 = vmatpush.bf16.msra.mxu0 0
    %86 = vmatpush.bf16.msra.mxu0 0
    %87 = vmatpush.bf16.msra.mxu0 0
    %88 = vmatpush.bf16.msra.mxu0 0
    %89 = vmatpush.bf16.msra.mxu0 0
    %90 = vmatpush.bf16.msra.mxu0 0
    %91 = vmatpush.bf16.msra.mxu0 0
    %92 = vmatpush.bf16.msra.mxu0 %v70
    %93 = vmatmul.bf16.gmra.mxu0 %v63
    %v94 = vpop.f32.mrf.mxu0
    %v95 = vadd.f32 0.0, %v94
    %v96 = vpop.f32.mrf.mxu0
    %97 = vdwg.mxu0
    %v100 = vunpack.c.l.b16 %v53
    %v101 = vunpack.c.h.b16 %v53
    %v102 = vunpack.c.l.b16 %v54
    %v103 = vunpack.c.h.b16 %v54
    %v104 = vpack.c.b16 %v102, %v100
    %v105 = vpack.c.b16 %v103, %v101
    %vm108 = vcmask 130048
    %v110 = vsel %vm108, %v50, 0
    %112 = vmatpush.bf16.msra.mxu0 0
    %113 = vmatpush.bf16.msra.mxu0 0
    %114 = vmatpush.bf16.msra.mxu0 0
    %115 = vmatpush.bf16.msra.mxu0 0
    %116 = vmatpush.bf16.msra.mxu0 0
    %117 = vmatpush.bf16.msra.mxu0 0
    %118 = vmatpush.bf16.msra.mxu0 0
    %119 = vmatpush.bf16.msra.mxu0 %v104
    %120 = vmatmul.bf16.gmra.mxu0 %v110
    %v121 = vpop.f32.mrf.mxu0
    %v122 = vadd.f32 %v82, %v121
    %v123 = vpop.f32.mrf.mxu0
    %124 = vdwg.mxu0
    %125 = vmatpush.bf16.msra.mxu0 0
    %126 = vmatpush.bf16.msra.mxu0 0
    %127 = vmatpush.bf16.msra.mxu0 0
    %128 = vmatpush.bf16.msra.mxu0 0
    %129 = vmatpush.bf16.msra.mxu0 0
    %130 = vmatpush.bf16.msra.mxu0 0
    %131 = vmatpush.bf16.msra.mxu0 0
    %132 = vmatpush.bf16.msra.mxu0 %v105
    %133 = vmatmul.bf16.gmra.mxu0 %v110
    %v134 = vpop.f32.mrf.mxu0
    %v135 = vadd.f32 %v95, %v134
    %v136 = vpop.f32.mrf.mxu0
    %137 = vdwg.mxu0
    %v138 = vld [vmem:[%s4] sm:$0x3]
    %v140 = vperm.slane %v138, 0
    %v141 = vperm.slane %v138, 1
    %v144 = vadd.f32 %v122, %v140
    %v145 = vadd.f32 %v135, %v141
    %v146 = vmax.f32 %v144, 0.0
    %v147 = vmax.f32 %v145, 0.0
    %v148 = vpack.c.bf16 %v146, %v146
    %v149 = vpack.c.bf16 %v147, %v147
    %v150 = vld [vmem:[#allocation2] sm:$0xff]
    %v151 = vld [vmem:[#allocation2 + $0x8] sm:$0xff]
    %v152 = vld [vmem:[#allocation2 + $0x10] sm:$0xff]
    %v153 = vld [vmem:[#allocation2 + $0x18] sm:$0xff]
    %v154 = vld [vmem:[#allocation2 + $0x20] sm:$0xff]
    %v155 = vld [vmem:[#allocation2 + $0x28] sm:$0xff]
    %v156 = vld [vmem:[#allocation2 + $0x30] sm:$0xff]
    %v157 = vld [vmem:[#allocation2 + $0x38] sm:$0xff]
    %v158 = vld [vmem:[#allocation2 + $0x40] sm:$0xff]
    %v159 = vld [vmem:[#allocation2 + $0x48] sm:$0xff]
    %v160 = vld [vmem:[#allocation2 + $0x50] sm:$0xff]
    %v161 = vld [vmem:[#allocation2 + $0x58] sm:$0xff]
    %v162 = vld [vmem:[#allocation2 + $0x60] sm:$0xff]
    %v163 = vld [vmem:[#allocation2 + $0x68] sm:$0xff]
    %v164 = vld [vmem:[#allocation2 + $0x70] sm:$0xff]
    %v165 = vld [vmem:[#allocation2 + $0x78] sm:$0xff]
    %v166 = vld [vmem:[#allocation2 + $0x80] sm:$0xff]
    %v167 = vld [vmem:[#allocation2 + $0x88] sm:$0xff]
    %v168 = vld [vmem:[#allocation2 + $0x90] sm:$0xff]
    %v169 = vld [vmem:[#allocation2 + $0x98] sm:$0xff]
    %v170 = vld [vmem:[#allocation2 + $0xa0] sm:$0xff]
    %v171 = vld [vmem:[#allocation2 + $0xa8] sm:$0xff]
    %v172 = vld [vmem:[#allocation2 + $0xb0] sm:$0xff]
    %v173 = vld [vmem:[#allocation2 + $0xb8] sm:$0xff]
    %v174 = vld [vmem:[#allocation2 + $0xc0] sm:$0xff]
    %v175 = vld [vmem:[#allocation2 + $0xc8] sm:$0xff]
    %v176 = vld [vmem:[#allocation2 + $0xd0] sm:$0xff]
    %v177 = vld [vmem:[#allocation2 + $0xd8] sm:$0xff]
    %v178 = vld [vmem:[#allocation2 + $0xe0] sm:$0xff]
    %v179 = vld [vmem:[#allocation2 + $0xe8] sm:$0xff]
    %v180 = vld [vmem:[#allocation2 + $0xf0] sm:$0xff]
    %v181 = vld [vmem:[#allocation2 + $0xf8] sm:$0xff]
    %v182 = vld [vmem:[%s6] sm:$0x3]
    %v184 = vperm.slane %v182, 0
    %v185 = vperm.slane %v182, 1
    %v220 = vunpack.c.l.b16 %v150
    %v221 = vunpack.c.h.b16 %v150
    %v222 = vunpack.c.l.b16 %v151
    %v223 = vunpack.c.h.b16 %v151
    %v224 = vunpack.c.l.b16 %v152
    %v225 = vunpack.c.h.b16 %v152
    %v226 = vunpack.c.l.b16 %v153
    %v227 = vunpack.c.h.b16 %v153
    %v228 = vunpack.c.l.b16 %v154
    %v229 = vunpack.c.h.b16 %v154
    %v230 = vunpack.c.l.b16 %v155
    %v231 = vunpack.c.h.b16 %v155
    %v232 = vunpack.c.l.b16 %v156
    %v233 = vunpack.c.h.b16 %v156
    %v234 = vunpack.c.l.b16 %v157
    %v235 = vunpack.c.h.b16 %v157
    %v236 = vunpack.c.l.b16 %v158
    %v237 = vunpack.c.h.b16 %v158
    %v238 = vunpack.c.l.b16 %v159
    %v239 = vunpack.c.h.b16 %v159
    %v240 = vunpack.c.l.b16 %v160
    %v241 = vunpack.c.h.b16 %v160
    %v242 = vunpack.c.l.b16 %v161
    %v243 = vunpack.c.h.b16 %v161
    %v244 = vunpack.c.l.b16 %v162
    %v245 = vunpack.c.h.b16 %v162
    %v246 = vunpack.c.l.b16 %v163
    %v247 = vunpack.c.h.b16 %v163
    %v248 = vunpack.c.l.b16 %v164
    %v249 = vunpack.c.h.b16 %v164
    %v250 = vunpack.c.l.b16 %v165
    %v251 = vunpack.c.h.b16 %v165
    %v252 = vunpack.c.l.b16 %v166
    %v253 = vunpack.c.h.b16 %v166
    %v254 = vunpack.c.l.b16 %v167
    %v255 = vunpack.c.h.b16 %v167
    %v256 = vunpack.c.l.b16 %v168
    %v257 = vunpack.c.h.b16 %v168
    %v258 = vunpack.c.l.b16 %v169
    %v259 = vunpack.c.h.b16 %v169
    %v260 = vunpack.c.l.b16 %v170
    %v261 = vunpack.c.h.b16 %v170
    %v262 = vunpack.c.l.b16 %v171
    %v263 = vunpack.c.h.b16 %v171
    %v264 = vunpack.c.l.b16 %v172
    %v265 = vunpack.c.h.b16 %v172
    %v266 = vunpack.c.l.b16 %v173
    %v267 = vunpack.c.h.b16 %v173
    %v268 = vunpack.c.l.b16 %v174
    %v269 = vunpack.c.h.b16 %v174
    %v270 = vunpack.c.l.b16 %v175
    %v271 = vunpack.c.h.b16 %v175
    %v272 = vunpack.c.l.b16 %v176
    %v273 = vunpack.c.h.b16 %v176
    %v274 = vunpack.c.l.b16 %v177
    %v275 = vunpack.c.h.b16 %v177
    %v276 = vunpack.c.l.b16 %v178
    %v277 = vunpack.c.h.b16 %v178
    %v278 = vunpack.c.l.b16 %v179
    %v279 = vunpack.c.h.b16 %v179
    %v280 = vunpack.c.l.b16 %v180
    %v281 = vunpack.c.h.b16 %v180
    %v282 = vunpack.c.l.b16 %v181
    %v283 = vunpack.c.h.b16 %v181
    %v284 = vpack.c.b16 %v222, %v220
    %v285 = vpack.c.b16 %v223, %v221
    %v286 = vpack.c.b16 %v226, %v224
    %v287 = vpack.c.b16 %v227, %v225
    %v288 = vpack.c.b16 %v230, %v228
    %v289 = vpack.c.b16 %v231, %v229
    %v290 = vpack.c.b16 %v234, %v232
    %v291 = vpack.c.b16 %v235, %v233
    %v292 = vpack.c.b16 %v238, %v236
    %v293 = vpack.c.b16 %v239, %v237
    %v294 = vpack.c.b16 %v242, %v240
    %v295 = vpack.c.b16 %v243, %v241
    %v296 = vpack.c.b16 %v246, %v244
    %v297 = vpack.c.b16 %v247, %v245
    %v298 = vpack.c.b16 %v250, %v248
    %v299 = vpack.c.b16 %v251, %v249
    %v300 = vpack.c.b16 %v254, %v252
    %v301 = vpack.c.b16 %v255, %v253
    %v302 = vpack.c.b16 %v258, %v256
    %v303 = vpack.c.b16 %v259, %v257
    %v304 = vpack.c.b16 %v262, %v260
    %v305 = vpack.c.b16 %v263, %v261
    %v306 = vpack.c.b16 %v266, %v264
    %v307 = vpack.c.b16 %v267, %v265
    %v308 = vpack.c.b16 %v270, %v268
    %v309 = vpack.c.b16 %v271, %v269
    %v310 = vpack.c.b16 %v274, %v272
    %v311 = vpack.c.b16 %v275, %v273
    %v312 = vpack.c.b16 %v278, %v276
    %v313 = vpack.c.b16 %v279, %v277
    %v314 = vpack.c.b16 %v282, %v280
    %v315 = vpack.c.b16 %v283, %v281
    %348 = vmatpush.bf16.msra.mxu0 %v298
    %349 = vmatpush.bf16.msra.mxu0 %v296
    %350 = vmatpush.bf16.msra.mxu0 %v294
    %351 = vmatpush.bf16.msra.mxu0 %v292
    %352 = vmatpush.bf16.msra.mxu0 %v290
    %353 = vmatpush.bf16.msra.mxu0 %v288
    %354 = vmatpush.bf16.msra.mxu0 %v286
    %355 = vmatpush.bf16.msra.mxu0 %v284
    %356 = vmatmul.bf16.gmra.mxu0 %v148
    %v357 = vpop.f32.mrf.mxu0
    %v358 = vadd.f32 %v184, %v357
    %v359 = vpop.f32.mrf.mxu0
    %360 = vdwg.mxu0
    %361 = vmatpush.bf16.msra.mxu0 %v314
    %362 = vmatpush.bf16.msra.mxu0 %v312
    %363 = vmatpush.bf16.msra.mxu0 %v310
    %364 = vmatpush.bf16.msra.mxu0 %v308
    %365 = vmatpush.bf16.msra.mxu0 %v306
    %366 = vmatpush.bf16.msra.mxu0 %v304
    %367 = vmatpush.bf16.msra.mxu0 %v302
    %368 = vmatpush.bf16.msra.mxu0 %v300
    %369 = vmatmul.bf16.gmra.mxu0 %v149
    %v370 = vpop.f32.mrf.mxu0
    %v371 = vadd.f32 %v358, %v370
    %v372 = vpop.f32.mrf.mxu0
    %373 = vdwg.mxu0
    %374 = vmatpush.bf16.msra.mxu0 %v299
    %375 = vmatpush.bf16.msra.mxu0 %v297
    %376 = vmatpush.bf16.msra.mxu0 %v295
    %377 = vmatpush.bf16.msra.mxu0 %v293
    %378 = vmatpush.bf16.msra.mxu0 %v291
    %379 = vmatpush.bf16.msra.mxu0 %v289
    %380 = vmatpush.bf16.msra.mxu0 %v287
    %381 = vmatpush.bf16.msra.mxu0 %v285
    %382 = vmatmul.bf16.gmra.mxu0 %v148
    %v383 = vpop.f32.mrf.mxu0
    %v384 = vadd.f32 %v185, %v383
    %v385 = vpop.f32.mrf.mxu0
    %386 = vdwg.mxu0
    %387 = vmatpush.bf16.msra.mxu0 %v315
    %388 = vmatpush.bf16.msra.mxu0 %v313
    %389 = vmatpush.bf16.msra.mxu0 %v311
    %390 = vmatpush.bf16.msra.mxu0 %v309
    %391 = vmatpush.bf16.msra.mxu0 %v307
    %392 = vmatpush.bf16.msra.mxu0 %v305
    %393 = vmatpush.bf16.msra.mxu0 %v303
    %394 = vmatpush.bf16.msra.mxu0 %v301
    %395 = vmatmul.bf16.gmra.mxu0 %v149
    %v396 = vpop.f32.mrf.mxu0
    %v397 = vadd.f32 %v384, %v396
    %v398 = vpop.f32.mrf.mxu0
    %399 = vdwg.mxu0
    %v400 = vmax.f32 %v371, 0.0
    %v401 = vmax.f32 %v397, 0.0
    %v402 = vpack.c.bf16 %v400, %v400
    %v403 = vpack.c.bf16 %v401, %v401
    %v404 = vld [vmem:[%s7] sm:$0xf]
    %v405 = vld [vmem:[%s7 + $0x4] sm:$0xf]
    %v406 = vld [vmem:[%s7 + $0x8] sm:$0xf]
    %v407 = vld [vmem:[%s7 + $0xc] sm:$0xf]
    %v408 = vld [vmem:[%s7 + $0x10] sm:$0xf]
    %v409 = vld [vmem:[%s7 + $0x14] sm:$0xf]
    %v410 = vld [vmem:[%s7 + $0x18] sm:$0xf]
    %v411 = vld [vmem:[%s7 + $0x1c] sm:$0xf]
    %v412 = vld [vmem:[%s7 + $0x20] sm:$0xf]
    %v413 = vld [vmem:[%s7 + $0x24] sm:$0xf]
    %v414 = vld [vmem:[%s7 + $0x28] sm:$0xf]
    %v415 = vld [vmem:[%s7 + $0x2c] sm:$0xf]
    %v416 = vld [vmem:[%s7 + $0x30] sm:$0xf]
    %v417 = vld [vmem:[%s7 + $0x34] sm:$0xf]
    %v418 = vld [vmem:[%s7 + $0x38] sm:$0xf]
    %v419 = vld [vmem:[%s7 + $0x3c] sm:$0xf]
    %v420 = vld [vmem:[%s7 + $0x40] sm:$0xf]
    %v421 = vld [vmem:[%s7 + $0x44] sm:$0xf]
    %v422 = vld [vmem:[%s7 + $0x48] sm:$0xf]
    %v423 = vld [vmem:[%s7 + $0x4c] sm:$0xf]
    %v424 = vld [vmem:[%s7 + $0x50] sm:$0xf]
    %v425 = vld [vmem:[%s7 + $0x54] sm:$0xf]
    %v426 = vld [vmem:[%s7 + $0x58] sm:$0xf]
    %v427 = vld [vmem:[%s7 + $0x5c] sm:$0xf]
    %v428 = vld [vmem:[%s7 + $0x60] sm:$0xf]
    %v429 = vld [vmem:[%s7 + $0x64] sm:$0xf]
    %v430 = vld [vmem:[%s7 + $0x68] sm:$0xf]
    %v431 = vld [vmem:[%s7 + $0x6c] sm:$0xf]
    %v432 = vld [vmem:[%s7 + $0x70] sm:$0xf]
    %v433 = vld [vmem:[%s7 + $0x74] sm:$0xf]
    %v434 = vld [vmem:[%s7 + $0x78] sm:$0xf]
    %v435 = vld [vmem:[%s7 + $0x7c] sm:$0xf]
    %v436 = vld [vmem:[%s8] sm:$0x1]
    %v438 = vperm.slane %v436, 0
    %v472 = vunpack.c.l.b16 %v404
    %v473 = vunpack.c.l.b16 %v405
    %v474 = vunpack.c.l.b16 %v406
    %v475 = vunpack.c.l.b16 %v407
    %v476 = vunpack.c.l.b16 %v408
    %v477 = vunpack.c.l.b16 %v409
    %v478 = vunpack.c.l.b16 %v410
    %v479 = vunpack.c.l.b16 %v411
    %v480 = vunpack.c.l.b16 %v412
    %v481 = vunpack.c.l.b16 %v413
    %v482 = vunpack.c.l.b16 %v414
    %v483 = vunpack.c.l.b16 %v415
    %v484 = vunpack.c.l.b16 %v416
    %v485 = vunpack.c.l.b16 %v417
    %v486 = vunpack.c.l.b16 %v418
    %v487 = vunpack.c.l.b16 %v419
    %v488 = vunpack.c.l.b16 %v420
    %v489 = vunpack.c.l.b16 %v421
    %v490 = vunpack.c.l.b16 %v422
    %v491 = vunpack.c.l.b16 %v423
    %v492 = vunpack.c.l.b16 %v424
    %v493 = vunpack.c.l.b16 %v425
    %v494 = vunpack.c.l.b16 %v426
    %v495 = vunpack.c.l.b16 %v427
    %v496 = vunpack.c.l.b16 %v428
    %v497 = vunpack.c.l.b16 %v429
    %v498 = vunpack.c.l.b16 %v430
    %v499 = vunpack.c.l.b16 %v431
    %v500 = vunpack.c.l.b16 %v432
    %v501 = vunpack.c.l.b16 %v433
    %v502 = vunpack.c.l.b16 %v434
    %v503 = vunpack.c.l.b16 %v435
    %v504 = vpack.c.b16 %v473, %v472
    %v505 = vpack.c.b16 %v475, %v474
    %v506 = vpack.c.b16 %v477, %v476
    %v507 = vpack.c.b16 %v479, %v478
    %v508 = vpack.c.b16 %v481, %v480
    %v509 = vpack.c.b16 %v483, %v482
    %v510 = vpack.c.b16 %v485, %v484
    %v511 = vpack.c.b16 %v487, %v486
    %v512 = vpack.c.b16 %v489, %v488
    %v513 = vpack.c.b16 %v491, %v490
    %v514 = vpack.c.b16 %v493, %v492
    %v515 = vpack.c.b16 %v495, %v494
    %v516 = vpack.c.b16 %v497, %v496
    %v517 = vpack.c.b16 %v499, %v498
    %v518 = vpack.c.b16 %v501, %v500
    %v519 = vpack.c.b16 %v503, %v502
    %536 = vmatpush.bf16.msra.mxu0 %v511
    %537 = vmatpush.bf16.msra.mxu0 %v510
    %538 = vmatpush.bf16.msra.mxu0 %v509
    %539 = vmatpush.bf16.msra.mxu0 %v508
    %540 = vmatpush.bf16.msra.mxu0 %v507
    %541 = vmatpush.bf16.msra.mxu0 %v506
    %542 = vmatpush.bf16.msra.mxu0 %v505
    %543 = vmatpush.bf16.msra.mxu0 %v504
    %544 = vmatmul.bf16.gmra.mxu0 %v402
    %v545 = vpop.f32.mrf.mxu0
    %v546 = vadd.f32 %v438, %v545
    %v547 = vpop.f32.mrf.mxu0
    %548 = vdwg.mxu0
    %549 = vmatpush.bf16.msra.mxu0 %v519
    %550 = vmatpush.bf16.msra.mxu0 %v518
    %551 = vmatpush.bf16.msra.mxu0 %v517
    %552 = vmatpush.bf16.msra.mxu0 %v516
    %553 = vmatpush.bf16.msra.mxu0 %v515
    %554 = vmatpush.bf16.msra.mxu0 %v514
    %555 = vmatpush.bf16.msra.mxu0 %v513
    %556 = vmatpush.bf16.msra.mxu0 %v512
    %557 = vmatmul.bf16.gmra.mxu0 %v403
    %v558 = vpop.f32.mrf.mxu0
    %v559 = vadd.f32 %v546, %v558
    %v560 = vpop.f32.mrf.mxu0
    %561 = vdwg.mxu0
    %562 = vst.msk [vmem:[%s9] sm:$0xff] %vm61, %v559
    // Predicated region
    $region42: #{critic_forward.1} parent=1 // pred_check
      _
    $region43: #{critic_forward.1} parent=1 // pred_check_branch
      %564 = sbr.rel (0) target = $region45
    $region44: #{critic_forward.1} parent=1 // pred_region
      _
    $region45: #{critic_forward.1} parent=1 // pred_fallthru
      _
    // Predicated region
    $region46: #{critic_forward.1} parent=1 // pred_check
      _
    $region47: #{critic_forward.1} parent=1 // pred_check_branch
      %566 = sbr.rel (0) target = $region49
    $region48: #{critic_forward.1} parent=1 // pred_region
      _
    $region49: #{critic_forward.1} parent=1 // pred_fallthru
      _
    %567 = vsyncpa [#allocation3], 1

</llo_original>
